<compile_context>
chip_gen: v7x
topology: tpu7x:2x2x1
jax: 0.10.0
libtpu: 0.0.40
codegen_flags: <defaults>
</compile_context>

<pallas_src>
import jax
import jax.numpy as jnp
from jax.experimental import pallas as pl
from jax.experimental.pallas import tpu as pltpu


# ----------------------------------------------------------------------------
# Kernel 1: fused im2col-matmul + folded BatchNorm (scale/bias) + ReLU
#   a_ref : (TM, K)      patch rows              (K = C_in * 7 * 7)
#   w_ref : (K, C_out)   conv weights as matrix
#   s_ref : (1, C_out)   gamma / sqrt(var + eps)
#   b_ref : (1, C_out)   beta - mean * scale
#   o_ref : (TM, C_out)  relu(A @ W * scale + bias)
# ----------------------------------------------------------------------------
def _conv_bn_relu_kernel(a_ref, w_ref, s_ref, b_ref, o_ref):
    acc = jnp.dot(a_ref[...], w_ref[...], preferred_element_type=jnp.float32)
    y = acc * s_ref[...] + b_ref[...]          # folded BN: multiply, no divide
    o_ref[...] = jnp.maximum(y, 0.0).astype(o_ref.dtype)


def _conv_bn_relu_matmul(patches, w_mat, scale, bias, *, tm):
    M, K = patches.shape
    Kw, C_out = w_mat.shape
    assert K == Kw and M % tm == 0 and tm % 8 == 0
    grid = (M // tm,)
    flops = 2 * M * K * C_out + 3 * M * C_out
    bytes_accessed = 4 * (M * K + K * C_out + 2 * C_out + M * C_out)
    return pl.pallas_call(
        _conv_bn_relu_kernel,
        out_shape=jax.ShapeDtypeStruct((M, C_out), jnp.float32),
        grid_spec=pltpu.PrefetchScalarGridSpec(
            num_scalar_prefetch=0,
            grid=grid,
            in_specs=[
                pl.BlockSpec((tm, K), lambda i: (i, 0)),
                pl.BlockSpec((K, C_out), lambda i: (0, 0)),
                pl.BlockSpec((1, C_out), lambda i: (0, 0)),
                pl.BlockSpec((1, C_out), lambda i: (0, 0)),
            ],
            out_specs=pl.BlockSpec((tm, C_out), lambda i: (i, 0)),
        ),
        compiler_params=pltpu.CompilerParams(
            dimension_semantics=("parallel",),
        ),
        cost_estimate=pl.CostEstimate(
            flops=flops, transcendentals=0, bytes_accessed=bytes_accessed),
    )(patches, w_mat, scale, bias)


# ----------------------------------------------------------------------------
# Kernel 2: 3x3 / stride-2 / pad-1 max pool via parity-decomposed inputs.
#   ee[i,j] = xpad[2i, 2j], eo[i,j] = xpad[2i, 2j+1],
#   oe[i,j] = xpad[2i+1, 2j], oo[i,j] = xpad[2i+1, 2j+1]
#   out[oh,ow] = max over the 9 window elements, which map to contiguous slices
#   of ee/eo/oe/oo — pure VPU max tree, no strided loads.
# ----------------------------------------------------------------------------
def _maxpool_kernel(ee_ref, eo_ref, oe_ref, oo_ref, o_ref):
    Hq, Wq = o_ref.shape[1], o_ref.shape[2]
    ee = ee_ref[...]
    eo = eo_ref[...]
    oe = oe_ref[...]
    oo = oo_ref[...]
    m = oo[:, :Hq, :Wq, :]
    for a in (0, 1):
        for b in (0, 1):
            m = jnp.maximum(m, ee[:, a:a + Hq, b:b + Wq, :])
        m = jnp.maximum(m, eo[:, a:a + Hq, :Wq, :])
    for b in (0, 1):
        m = jnp.maximum(m, oe[:, :Hq, b:b + Wq, :])
    o_ref[...] = m


def _maxpool_3x3_s2_p1(y_nhwc):
    """y_nhwc: (N, H, W, C) with H, W even.  Returns (N, H//2, W//2, C)."""
    N, H, W, C = y_nhwc.shape
    Hq, Wq = H // 2, W // 2
    y_pad = jnp.pad(y_nhwc, ((0, 0), (1, 1), (1, 1), (0, 0)),
                    constant_values=float("-inf"))
    # Parity decomposition (wrapper-side data movement only).
    ee = y_pad[:, 0::2, 0::2, :]   # (N, Hq+1, Wq+1, C)
    eo = y_pad[:, 0::2, 1::2, :]
    oe = y_pad[:, 1::2, 0::2, :]
    oo = y_pad[:, 1::2, 1::2, :]
    Hp, Wp = ee.shape[1], ee.shape[2]
    in_spec = pl.BlockSpec((1, Hp, Wp, C), lambda b: (b, 0, 0, 0))
    return pl.pallas_call(
        _maxpool_kernel,
        out_shape=jax.ShapeDtypeStruct((N, Hq, Wq, C), y_nhwc.dtype),
        grid_spec=pltpu.PrefetchScalarGridSpec(
            num_scalar_prefetch=0,
            grid=(N,),
            in_specs=[in_spec, in_spec, in_spec, in_spec],
            out_specs=pl.BlockSpec((1, Hq, Wq, C), lambda b: (b, 0, 0, 0)),
        ),
        compiler_params=pltpu.CompilerParams(
            dimension_semantics=("parallel",),
        ),
    )(ee, eo, oe, oo)


# ----------------------------------------------------------------------------
# Wrapper: full thermal_module forward (conv1 -> bn1 -> relu -> maxpool).
# ----------------------------------------------------------------------------
def thermal_stem_pallas(x, w_oihw, gamma, beta, mean, var, eps=1e-5):
    N, C_in, H, W = x.shape
    C_out, C_in_w, KH, KW = w_oihw.shape
    assert C_in == C_in_w and KH == 7 and KW == 7
    stride, pad = 2, 3
    H1 = (H + 2 * pad - KH) // stride + 1
    W1 = (W + 2 * pad - KW) // stride + 1
    assert H1 % 2 == 0 and W1 % 2 == 0

    # im2col patch extraction (layout plumbing; all compute stays in Pallas).
    x_nhwc = jnp.transpose(x, (0, 2, 3, 1)).astype(jnp.float32)
    x_p = jnp.pad(x_nhwc, ((0, 0), (pad, pad), (pad, pad), (0, 0)))
    slabs = []
    for kh in range(KH):
        for kw in range(KW):
            slabs.append(
                x_p[:, kh:kh + stride * H1:stride, kw:kw + stride * W1:stride, :])
    patches = jnp.concatenate(slabs, axis=-1)                # (N, H1, W1, K)
    K = KH * KW * C_in
    M = N * H1 * W1
    patches = patches.reshape(M, K)

    # Weights -> (K, C_out) with matching (kh, kw, cin) flattening order.
    w_mat = jnp.transpose(w_oihw, (2, 3, 1, 0)).reshape(K, C_out)
    w_mat = w_mat.astype(jnp.float32)

    # Fold inference-mode BatchNorm into a per-channel scale / bias.
    scale = (gamma / jnp.sqrt(var + eps)).astype(jnp.float32)
    bias = (beta - mean * scale).astype(jnp.float32)

    # Tiny problems collapse to a single grid step; larger M tiles at 512 rows
    # (<< scoped VMEM on v5e/v6e/v7x even with double buffering).
    tm = M if M <= 1024 else 512
    assert M % tm == 0 and tm % 8 == 0

    y = _conv_bn_relu_matmul(patches, w_mat,
                             scale.reshape(1, C_out), bias.reshape(1, C_out),
                             tm=tm)
    y = y.reshape(N, H1, W1, C_out)                          # NHWC, >= 0

    p = _maxpool_3x3_s2_p1(y)                                # (N, H1//2, W1//2, C_out)
    return jnp.transpose(p, (0, 3, 1, 2))                    # back to NCHW


# ----------------------------------------------------------------------------
# Pure-JAX reference matching the PyTorch forward exactly (inference BN).
# ----------------------------------------------------------------------------
def thermal_stem_ref(x, w, gamma, beta, mean, var, eps=1e-5):
    y = jax.lax.conv_general_dilated(
        x, w, window_strides=(2, 2), padding=((3, 3), (3, 3)),
        dimension_numbers=("NCHW", "OIHW", "NCHW"))
    scale = gamma / jnp.sqrt(var + eps)
    shift = beta - mean * scale
    y = y * scale[None, :, None, None] + shift[None, :, None, None]
    y = jnp.maximum(y, 0.0)
    y = jax.lax.reduce_window(
        y, -jnp.inf, jax.lax.max,
        window_dimensions=(1, 1, 3, 3),
        window_strides=(1, 1, 2, 2),
        padding=((0, 0), (0, 0), (1, 1), (1, 1)))
    return y


if __name__ == "__main__":
    key = jax.random.PRNGKey(0)
    k_x, k_w, k_g, k_b, k_m, k_v = jax.random.split(key, 6)

    N, C_in, H, W = 2, 3, 32, 32
    C_out = 64

    x = jax.random.normal(k_x, (N, C_in, H, W), dtype=jnp.float32)
    w = jax.random.normal(k_w, (C_out, C_in, 7, 7), dtype=jnp.float32) * 0.05
    gamma = 1.0 + 0.1 * jax.random.normal(k_g, (C_out,), dtype=jnp.float32)
    beta = 0.1 * jax.random.normal(k_b, (C_out,), dtype=jnp.float32)
    mean = 0.1 * jax.random.normal(k_m, (C_out,), dtype=jnp.float32)
    var = 1.0 + 0.1 * jax.random.uniform(k_v, (C_out,), dtype=jnp.float32)

    out = thermal_stem_pallas(x, w, gamma, beta, mean, var)
    out = jax.block_until_ready(out)

    ref = thermal_stem_ref(x, w, gamma, beta, mean, var)
    assert out.shape == ref.shape == (N, C_out, H // 4, W // 4), (out.shape, ref.shape)
    assert out.dtype == ref.dtype
    err = float(jnp.max(jnp.abs(out - ref)))
    assert err < 3e-3, f"max abs err {err}"

    print("KERNEL_OK")
</pallas_src>

<mosaic_0001>
module attributes {stable_mosaic.version = 11 : i64} {
  func.func @_conv_bn_relu_kernel(%arg0: i32, %arg1: memref<512x147xf32, #tpu.memory_space<vmem>>, %arg2: memref<147x64xf32, #tpu.memory_space<vmem>>, %arg3: memref<1x64xf32, #tpu.memory_space<vmem>>, %arg4: memref<1x64xf32, #tpu.memory_space<vmem>>, %arg5: memref<512x64xf32, #tpu.memory_space<vmem>>) attributes {dimension_semantics = [#tpu.dimension_semantics<parallel>], iteration_bounds = array<i64: 1>, scalar_prefetch = 0 : i64, scratch_operands = 0 : i64, tpu.core_type = #tpu.core_type<tc>, window_params = [{transform_indices = @transform_0, window_bounds = array<i64: 512, 147>}, {pipeline_mode = #tpu.pipeline_mode<synchronous>, transform_indices = @transform_1, window_bounds = array<i64: 147, 64>}, {pipeline_mode = #tpu.pipeline_mode<synchronous>, transform_indices = @transform_2, window_bounds = array<i64: 1, 64>}, {pipeline_mode = #tpu.pipeline_mode<synchronous>, transform_indices = @transform_3, window_bounds = array<i64: 1, 64>}, {transform_indices = @transform_4, window_bounds = array<i64: 512, 64>}]} {
    %c0 = arith.constant 0 : index
    %c0_0 = arith.constant 0 : index
    %0 = vector.load %arg1[%c0, %c0_0] : memref<512x147xf32, #tpu.memory_space<vmem>>, vector<512x147xf32>
    %c0_1 = arith.constant 0 : index
    %c0_2 = arith.constant 0 : index
    %1 = vector.load %arg2[%c0_1, %c0_2] : memref<147x64xf32, #tpu.memory_space<vmem>>, vector<147x64xf32>
    %cst = arith.constant dense<0.000000e+00> : vector<512x64xf32>
    %2 = tpu.matmul %0, %1, %cst {dimension_numbers = #tpu.dot_dimension_numbers<[1], [0], [0], [1], [0, 0, 1, 1], [], []>} : vector<512x147xf32>, vector<147x64xf32>, vector<512x64xf32> -> vector<512x64xf32>
    %c0_3 = arith.constant 0 : index
    %c0_4 = arith.constant 0 : index
    %3 = vector.load %arg3[%c0_3, %c0_4] : memref<1x64xf32, #tpu.memory_space<vmem>>, vector<1x64xf32>
    %4 = vector.broadcast %3 : vector<1x64xf32> to vector<512x64xf32>
    %5 = arith.mulf %2, %4 : vector<512x64xf32>
    %c0_5 = arith.constant 0 : index
    %c0_6 = arith.constant 0 : index
    %6 = vector.load %arg4[%c0_5, %c0_6] : memref<1x64xf32, #tpu.memory_space<vmem>>, vector<1x64xf32>
    %7 = vector.broadcast %6 : vector<1x64xf32> to vector<512x64xf32>
    %8 = arith.addf %5, %7 : vector<512x64xf32>
    %cst_7 = arith.constant 0.000000e+00 : f32
    %9 = vector.broadcast %cst_7 : f32 to vector<512x64xf32>
    %10 = arith.maximumf %8, %9 : vector<512x64xf32>
    %c0_8 = arith.constant 0 : index
    %c0_9 = arith.constant 0 : index
    %11 = vector.load %arg5[%c0_8, %c0_9] : memref<512x64xf32, #tpu.memory_space<vmem>>, vector<512x64xf32>
    tpu.vector_store %arg5[%c0_8, %c0_9], %10 {strides = array<i32>} : memref<512x64xf32, #tpu.memory_space<vmem>>, vector<512x64xf32>,
    return
  }
  func.func @transform_0(%arg0: i32) -> (i32, i32) {
    %c0_i32 = arith.constant 0 : i32
    %c0_i32_0 = arith.constant 0 : i32
    return %arg0, %c0_i32 : i32, i32
  }
  func.func @transform_1(%arg0: i32) -> (i32, i32) {
    %c0_i32 = arith.constant 0 : i32
    %c0_i32_0 = arith.constant 0 : i32
    %c0_i32_1 = arith.constant 0 : i32
    return %c0_i32, %c0_i32_0 : i32, i32
  }
  func.func @transform_2(%arg0: i32) -> (i32, i32) {
    %c0_i32 = arith.constant 0 : i32
    %c0_i32_0 = arith.constant 0 : i32
    %c0_i32_1 = arith.constant 0 : i32
    return %c0_i32, %c0_i32_0 : i32, i32
  }
  func.func @transform_3(%arg0: i32) -> (i32, i32) {
    %c0_i32 = arith.constant 0 : i32
    %c0_i32_0 = arith.constant 0 : i32
    %c0_i32_1 = arith.constant 0 : i32
    return %c0_i32, %c0_i32_0 : i32, i32
  }
  func.func @transform_4(%arg0: i32) -> (i32, i32) {
    %c0_i32 = arith.constant 0 : i32
    %c0_i32_0 = arith.constant 0 : i32
    return %arg0, %c0_i32 : i32, i32
  }
}

</mosaic_0001>

<llo_original>
// kernel: tpu_custom_call.1
$region0: #{tpu_custom_call.1}
  #allocation0 [shape = 'u32[]', space=smem, size = 0x4, offset = 0x4, fixed_abs, tag = 'smem constant byte address 0x4 - core index']
  #allocation1 [shape = 'u32[144,128]{1,0:T(1,128)}', space=vmem, size = 0x12000, scoped, tag = 'internal scratch']
  %s0 = inlined_call_operand.vmem [shape: f32[512,147], index: 0, kind: input, shape index: {}]
  %s1 = inlined_call_operand.vmem [shape: f32[147,64], index: 1, kind: input, shape index: {}]
  %s2 = inlined_call_operand.vmem [shape: f32[1,64], index: 2, kind: input, shape index: {}]
  %s3 = inlined_call_operand.vmem [shape: f32[1,64], index: 3, kind: input, shape index: {}]
  %s4 = inlined_call_operand.vmem [shape: f32[512,64], index: 4, kind: output, shape index: {}]
  %s5 = sld [smem:[#allocation0]]
  $region26: #{tpu_custom_call.1} parent=0
    _
  %s7 = ssub.s32 1, %s5
  %s8 = scalar_select 0, %s7, %s5
  // Predicated region
  $region2: #{tpu_custom_call.1} parent=0 // pred_check
    _
  $region3: #{tpu_custom_call.1} parent=0 // pred_check_branch
    %10 = sbr.rel (0) target = $region5
  $region4: #{tpu_custom_call.1} parent=0 // pred_region
    _
  $region5: #{tpu_custom_call.1} parent=0 // pred_fallthru
    _
  // Predicated region
  $region6: #{tpu_custom_call.1} parent=0 // pred_check
    _
  $region7: #{tpu_custom_call.1} parent=0 // pred_check_branch
    %12 = sbr.rel (0) target = $region9
  $region8: #{tpu_custom_call.1} parent=0 // pred_region
    _
  $region9: #{tpu_custom_call.1} parent=0 // pred_fallthru
    _
  // Predicated region
  $region10: #{tpu_custom_call.1} parent=0 // pred_check
    _
  $region11: #{tpu_custom_call.1} parent=0 // pred_check_branch
    %14 = sbr.rel (0) target = $region13
  $region12: #{tpu_custom_call.1} parent=0 // pred_region
    _
  $region13: #{tpu_custom_call.1} parent=0 // pred_fallthru
    _
  // Predicated region
  $region14: #{tpu_custom_call.1} parent=0 // pred_check
    _
  $region15: #{tpu_custom_call.1} parent=0 // pred_check_branch
    %16 = sbr.rel (0) target = $region17
  $region16: #{tpu_custom_call.1} parent=0 // pred_region
    _
  $region17: #{tpu_custom_call.1} parent=0 // pred_fallthru
    _
  %v17 = vld [vmem:[%s0] sm:$0xff]
  %v18 = vld [vmem:[%s0 + $0x8] sm:$0xff]
  %v19 = vld [vmem:[%s0 + $0x10] sm:$0xff]
  %v20 = vld [vmem:[%s0 + $0x18] sm:$0xff]
  %v21 = vld [vmem:[%s0 + $0x20] sm:$0xff]
  %v22 = vld [vmem:[%s0 + $0x28] sm:$0xff]
  %v23 = vld [vmem:[%s0 + $0x30] sm:$0xff]
  %v24 = vld [vmem:[%s0 + $0x38] sm:$0xff]
  %v25 = vld [vmem:[%s0 + $0x40] sm:$0xff]
  %v26 = vld [vmem:[%s0 + $0x48] sm:$0xff]
  %v27 = vld [vmem:[%s0 + $0x50] sm:$0xff]
  %v28 = vld [vmem:[%s0 + $0x58] sm:$0xff]
  %v29 = vld [vmem:[%s0 + $0x60] sm:$0xff]
  %v30 = vld [vmem:[%s0 + $0x68] sm:$0xff]
  %v31 = vld [vmem:[%s0 + $0x70] sm:$0xff]
  %v32 = vld [vmem:[%s0 + $0x78] sm:$0xff]
  %v33 = vld [vmem:[%s0 + $0x80] sm:$0xff]
  %v34 = vld [vmem:[%s0 + $0x88] sm:$0xff]
  %v35 = vld [vmem:[%s0 + $0x90] sm:$0xff]
  %v36 = vld [vmem:[%s0 + $0x98] sm:$0xff]
  %v37 = vld [vmem:[%s0 + $0xa0] sm:$0xff]
  %v38 = vld [vmem:[%s0 + $0xa8] sm:$0xff]
  %v39 = vld [vmem:[%s0 + $0xb0] sm:$0xff]
  %v40 = vld [vmem:[%s0 + $0xb8] sm:$0xff]
  %v41 = vld [vmem:[%s0 + $0xc0] sm:$0xff]
  %v42 = vld [vmem:[%s0 + $0xc8] sm:$0xff]
  %v43 = vld [vmem:[%s0 + $0xd0] sm:$0xff]
  %v44 = vld [vmem:[%s0 + $0xd8] sm:$0xff]
  %v45 = vld [vmem:[%s0 + $0xe0] sm:$0xff]
  %v46 = vld [vmem:[%s0 + $0xe8] sm:$0xff]
  %v47 = vld [vmem:[%s0 + $0xf0] sm:$0xff]
  %v48 = vld [vmem:[%s0 + $0xf8] sm:$0xff]
  %v49 = vld [vmem:[%s0 + $0x100] sm:$0xff]
  %v50 = vld [vmem:[%s0 + $0x108] sm:$0xff]
  %v51 = vld [vmem:[%s0 + $0x110] sm:$0xff]
  %v52 = vld [vmem:[%s0 + $0x118] sm:$0xff]
  %v53 = vld [vmem:[%s0 + $0x120] sm:$0xff]
  %v54 = vld [vmem:[%s0 + $0x128] sm:$0xff]
  %v55 = vld [vmem:[%s0 + $0x130] sm:$0xff]
  %v56 = vld [vmem:[%s0 + $0x138] sm:$0xff]
  %v57 = vld [vmem:[%s0 + $0x140] sm:$0xff]
  %v58 = vld [vmem:[%s0 + $0x148] sm:$0xff]
  %v59 = vld [vmem:[%s0 + $0x150] sm:$0xff]
  %v60 = vld [vmem:[%s0 + $0x158] sm:$0xff]
  %v61 = vld [vmem:[%s0 + $0x160] sm:$0xff]
  %v62 = vld [vmem:[%s0 + $0x168] sm:$0xff]
  %v63 = vld [vmem:[%s0 + $0x170] sm:$0xff]
  %v64 = vld [vmem:[%s0 + $0x178] sm:$0xff]
  %v65 = vld [vmem:[%s0 + $0x180] sm:$0xff]
  %v66 = vld [vmem:[%s0 + $0x188] sm:$0xff]
  %v67 = vld [vmem:[%s0 + $0x190] sm:$0xff]
  %v68 = vld [vmem:[%s0 + $0x198] sm:$0xff]
  %v69 = vld [vmem:[%s0 + $0x1a0] sm:$0xff]
  %v70 = vld [vmem:[%s0 + $0x1a8] sm:$0xff]
  %v71 = vld [vmem:[%s0 + $0x1b0] sm:$0xff]
  %v72 = vld [vmem:[%s0 + $0x1b8] sm:$0xff]
  %v73 = vld [vmem:[%s0 + $0x1c0] sm:$0xff]
  %v74 = vld [vmem:[%s0 + $0x1c8] sm:$0xff]
  %v75 = vld [vmem:[%s0 + $0x1d0] sm:$0xff]
  %v76 = vld [vmem:[%s0 + $0x1d8] sm:$0xff]
  %v77 = vld [vmem:[%s0 + $0x1e0] sm:$0xff]
  %v78 = vld [vmem:[%s0 + $0x1e8] sm:$0xff]
  %v79 = vld [vmem:[%s0 + $0x1f0] sm:$0xff]
  %v80 = vld [vmem:[%s0 + $0x1f8] sm:$0xff]
  %v81 = vld [vmem:[%s0 + $0x200] sm:$0xff]
  %v82 = vld [vmem:[%s0 + $0x208] sm:$0xff]
  %v83 = vld [vmem:[%s0 + $0x210] sm:$0xff]
  %v84 = vld [vmem:[%s0 + $0x218] sm:$0xff]
  %v85 = vld [vmem:[%s0 + $0x220] sm:$0xff]
  %v86 = vld [vmem:[%s0 + $0x228] sm:$0xff]
  %v87 = vld [vmem:[%s0 + $0x230] sm:$0xff]
  %v88 = vld [vmem:[%s0 + $0x238] sm:$0xff]
  %v89 = vld [vmem:[%s0 + $0x240] sm:$0xff]
  %v90 = vld [vmem:[%s0 + $0x248] sm:$0xff]
  %v91 = vld [vmem:[%s0 + $0x250] sm:$0xff]
  %v92 = vld [vmem:[%s0 + $0x258] sm:$0xff]
  %v93 = vld [vmem:[%s0 + $0x260] sm:$0xff]
  %v94 = vld [vmem:[%s0 + $0x268] sm:$0xff]
  %v95 = vld [vmem:[%s0 + $0x270] sm:$0xff]
  %v96 = vld [vmem:[%s0 + $0x278] sm:$0xff]
  %v97 = vld [vmem:[%s0 + $0x280] sm:$0xff]
  %v98 = vld [vmem:[%s0 + $0x288] sm:$0xff]
  %v99 = vld [vmem:[%s0 + $0x290] sm:$0xff]
  %v100 = vld [vmem:[%s0 + $0x298] sm:$0xff]
  %v101 = vld [vmem:[%s0 + $0x2a0] sm:$0xff]
  %v102 = vld [vmem:[%s0 + $0x2a8] sm:$0xff]
  %v103 = vld [vmem:[%s0 + $0x2b0] sm:$0xff]
  %v104 = vld [vmem:[%s0 + $0x2b8] sm:$0xff]
  %v105 = vld [vmem:[%s0 + $0x2c0] sm:$0xff]
  %v106 = vld [vmem:[%s0 + $0x2c8] sm:$0xff]
  %v107 = vld [vmem:[%s0 + $0x2d0] sm:$0xff]
  %v108 = vld [vmem:[%s0 + $0x2d8] sm:$0xff]
  %v109 = vld [vmem:[%s0 + $0x2e0] sm:$0xff]
  %v110 = vld [vmem:[%s0 + $0x2e8] sm:$0xff]
  %v111 = vld [vmem:[%s0 + $0x2f0] sm:$0xff]
  %v112 = vld [vmem:[%s0 + $0x2f8] sm:$0xff]
  %v113 = vld [vmem:[%s0 + $0x300] sm:$0xff]
  %v114 = vld [vmem:[%s0 + $0x308] sm:$0xff]
  %v115 = vld [vmem:[%s0 + $0x310] sm:$0xff]
  %v116 = vld [vmem:[%s0 + $0x318] sm:$0xff]
  %v117 = vld [vmem:[%s0 + $0x320] sm:$0xff]
  %v118 = vld [vmem:[%s0 + $0x328] sm:$0xff]
  %v119 = vld [vmem:[%s0 + $0x330] sm:$0xff]
  %v120 = vld [vmem:[%s0 + $0x338] sm:$0xff]
  %v121 = vld [vmem:[%s0 + $0x340] sm:$0xff]
  %v122 = vld [vmem:[%s0 + $0x348] sm:$0xff]
  %v123 = vld [vmem:[%s0 + $0x350] sm:$0xff]
  %v124 = vld [vmem:[%s0 + $0x358] sm:$0xff]
  %v125 = vld [vmem:[%s0 + $0x360] sm:$0xff]
  %v126 = vld [vmem:[%s0 + $0x368] sm:$0xff]
  %v127 = vld [vmem:[%s0 + $0x370] sm:$0xff]
  %v128 = vld [vmem:[%s0 + $0x378] sm:$0xff]
  %v129 = vld [vmem:[%s0 + $0x380] sm:$0xff]
  %v130 = vld [vmem:[%s0 + $0x388] sm:$0xff]
  %v131 = vld [vmem:[%s0 + $0x390] sm:$0xff]
  %v132 = vld [vmem:[%s0 + $0x398] sm:$0xff]
  %v133 = vld [vmem:[%s0 + $0x3a0] sm:$0xff]
  %v134 = vld [vmem:[%s0 + $0x3a8] sm:$0xff]
  %v135 = vld [vmem:[%s0 + $0x3b0] sm:$0xff]
  %v136 = vld [vmem:[%s0 + $0x3b8] sm:$0xff]
  %v137 = vld [vmem:[%s0 + $0x3c0] sm:$0xff]
  %v138 = vld [vmem:[%s0 + $0x3c8] sm:$0xff]
  %v139 = vld [vmem:[%s0 + $0x3d0] sm:$0xff]
  %v140 = vld [vmem:[%s0 + $0x3d8] sm:$0xff]
  %v141 = vld [vmem:[%s0 + $0x3e0] sm:$0xff]
  %v142 = vld [vmem:[%s0 + $0x3e8] sm:$0xff]
  %v143 = vld [vmem:[%s0 + $0x3f0] sm:$0xff]
  %v144 = vld [vmem:[%s0 + $0x3f8] sm:$0xff]
  %v145 = vld [vmem:[%s1] sm:$0xff]
  %v146 = vld [vmem:[%s1 + $0x8] sm:$0xff]
  %v147 = vld [vmem:[%s1 + $0x10] sm:$0xff]
  %v148 = vld [vmem:[%s1 + $0x18] sm:$0xff]
  %v149 = vld [vmem:[%s1 + $0x20] sm:$0xff]
  %v150 = vld [vmem:[%s1 + $0x28] sm:$0xff]
  %v151 = vld [vmem:[%s1 + $0x30] sm:$0xff]
  %v152 = vld [vmem:[%s1 + $0x38] sm:$0xff]
  %v153 = vld [vmem:[%s1 + $0x40] sm:$0xff]
  %v154 = vld [vmem:[%s1 + $0x48] sm:$0xff]
  %v155 = vld [vmem:[%s1 + $0x50] sm:$0xff]
  %v156 = vld [vmem:[%s1 + $0x58] sm:$0xff]
  %v157 = vld [vmem:[%s1 + $0x60] sm:$0xff]
  %v158 = vld [vmem:[%s1 + $0x68] sm:$0xff]
  %v159 = vld [vmem:[%s1 + $0x70] sm:$0xff]
  %v160 = vld [vmem:[%s1 + $0x78] sm:$0xff]
  %v161 = vld [vmem:[%s1 + $0x80] sm:$0xff]
  %v162 = vld [vmem:[%s1 + $0x88] sm:$0xff]
  %v163 = vld [vmem:[%s1 + $0x90] sm:$0x7]
  %vm164 = vcmask 154624
  %v166 = vsel %vm164, %v18, 0
  %v169 = vsel %vm164, %v20, 0
  %v172 = vsel %vm164, %v22, 0
  %v175 = vsel %vm164, %v24, 0
  %v178 = vsel %vm164, %v26, 0
  %v181 = vsel %vm164, %v28, 0
  %v184 = vsel %vm164, %v30, 0
  %v187 = vsel %vm164, %v32, 0
  %v190 = vsel %vm164, %v34, 0
  %v193 = vsel %vm164, %v36, 0
  %v196 = vsel %vm164, %v38, 0
  %v199 = vsel %vm164, %v40, 0
  %v202 = vsel %vm164, %v42, 0
  %v205 = vsel %vm164, %v44, 0
  %v208 = vsel %vm164, %v46, 0
  %v211 = vsel %vm164, %v48, 0
  %v214 = vsel %vm164, %v50, 0
  %v217 = vsel %vm164, %v52, 0
  %v220 = vsel %vm164, %v54, 0
  %v223 = vsel %vm164, %v56, 0
  %v226 = vsel %vm164, %v58, 0
  %v229 = vsel %vm164, %v60, 0
  %v232 = vsel %vm164, %v62, 0
  %v235 = vsel %vm164, %v64, 0
  %v238 = vsel %vm164, %v66, 0
  %v241 = vsel %vm164, %v68, 0
  %v244 = vsel %vm164, %v70, 0
  %v247 = vsel %vm164, %v72, 0
  %v250 = vsel %vm164, %v74, 0
  %v253 = vsel %vm164, %v76, 0
  %v256 = vsel %vm164, %v78, 0
  %v259 = vsel %vm164, %v80, 0
  %v262 = vsel %vm164, %v82, 0
  %v265 = vsel %vm164, %v84, 0
  %v268 = vsel %vm164, %v86, 0
  %v271 = vsel %vm164, %v88, 0
  %v274 = vsel %vm164, %v90, 0
  %v277 = vsel %vm164, %v92, 0
  %v280 = vsel %vm164, %v94, 0
  %v283 = vsel %vm164, %v96, 0
  %v286 = vsel %vm164, %v98, 0
  %v289 = vsel %vm164, %v100, 0
  %v292 = vsel %vm164, %v102, 0
  %v295 = vsel %vm164, %v104, 0
  %v298 = vsel %vm164, %v106, 0
  %v301 = vsel %vm164, %v108, 0
  %v304 = vsel %vm164, %v110, 0
  %v307 = vsel %vm164, %v112, 0
  %v310 = vsel %vm164, %v114, 0
  %v313 = vsel %vm164, %v116, 0
  %v316 = vsel %vm164, %v118, 0
  %v319 = vsel %vm164, %v120, 0
  %v322 = vsel %vm164, %v122, 0
  %v325 = vsel %vm164, %v124, 0
  %v328 = vsel %vm164, %v126, 0
  %v331 = vsel %vm164, %v128, 0
  %v334 = vsel %vm164, %v130, 0
  %v337 = vsel %vm164, %v132, 0
  %v340 = vsel %vm164, %v134, 0
  %v343 = vsel %vm164, %v136, 0
  %v346 = vsel %vm164, %v138, 0
  %v349 = vsel %vm164, %v140, 0
  %v352 = vsel %vm164, %v142, 0
  %v355 = vsel %vm164, %v144, 0
  %vm357 = vcmask 1042432
  %v359 = vsel %vm357, %v163, 0
  %361 = vmatprep.subr.mxu0 0.0
  %362 = vmatpush1.msra.mxu0 %v145
  %363 = vmatprep.subr.mxu0 0.0
  %364 = vmatpush1.msra.mxu0 %v146
  %365 = vmatprep.subr.mxu0 0.0
  %366 = vmatpush1.msra.mxu0 %v147
  %367 = vmatprep.subr.mxu0 0.0
  %368 = vmatpush1.msra.mxu0 %v148
  %369 = vmatprep.subr.mxu0 0.0
  %370 = vmatpush1.msra.mxu0 %v149
  %371 = vmatprep.subr.mxu0 0.0
  %372 = vmatpush1.msra.mxu0 %v150
  %373 = vmatprep.subr.mxu0 0.0
  %374 = vmatpush1.msra.mxu0 %v151
  %375 = vmatprep.subr.mxu0 0.0
  %376 = vmatpush1.msra.mxu0 %v152
  %377 = vmatprep.subr.mxu0 0.0
  %378 = vmatpush1.msra.mxu0 %v153
  %379 = vmatprep.subr.mxu0 0.0
  %380 = vmatpush1.msra.mxu0 %v154
  %381 = vmatprep.subr.mxu0 0.0
  %382 = vmatpush1.msra.mxu0 %v155
  %383 = vmatprep.subr.mxu0 0.0
  %384 = vmatpush1.msra.mxu0 %v156
  %385 = vmatprep.subr.mxu0 0.0
  %386 = vmatpush1.msra.mxu0 %v157
  %387 = vmatprep.subr.mxu0 0.0
  %388 = vmatpush1.msra.mxu0 %v158
  %389 = vmatprep.subr.mxu0 0.0
  %390 = vmatpush1.msra.mxu0 %v159
  %391 = vmatprep.subr.mxu0 0.0
  %392 = vmatpush1.msra.mxu0 %v160
  %393 = vmatprep.subr.mxu0 0.0
  %394 = vmatpush1.msra.mxu0 %v161
  %395 = vmatprep.subr.mxu0 0.0
  %396 = vmatpush1.msra.mxu0 %v162
  %397 = vmatprep.subr.mxu0 0.0
  %398 = vmatpush1.msra.mxu0 %v359
  %399 = vmatprep.subr.mxu0 0.0
  %400 = vmatpush1.msra.mxu0 0.0
  %401 = vmatprep.subr.mxu0 0.0
  %402 = vmatpush1.msra.mxu0 0.0
  %403 = vmatprep.subr.mxu0 0.0
  %404 = vmatpush1.msra.mxu0 0.0
  %405 = vmatprep.subr.mxu0 0.0
  %406 = vmatpush1.msra.mxu0 0.0
  %407 = vmatprep.subr.mxu0 0.0
  %408 = vmatpush1.msra.mxu0 0.0
  %409 = vmatprep.subr.mxu0 0.0
  %410 = vmatpush1.msra.mxu0 0.0
  %411 = vmatprep.subr.mxu0 0.0
  %412 = vmatpush1.msra.mxu0 0.0
  %413 = vmatprep.subr.mxu0 0.0
  %414 = vmatpush1.msra.mxu0 0.0
  %415 = vmatprep.subr.mxu0 0.0
  %416 = vmatpush1.msra.mxu0 0.0
  %417 = vmatprep.subr.mxu0 0.0
  %418 = vmatpush1.msra.mxu0 0.0
  %419 = vmatprep.subr.mxu0 0.0
  %420 = vmatpush1.msra.mxu0 0.0
  %421 = vmatprep.subr.mxu0 0.0
  %422 = vmatpush1.msra.mxu0 0.0
  %423 = vmatprep.subr.mxu0 0.0
  %424 = vmatpush1.msra.mxu0 0.0
  %425 = vmatprep.mubr.f32.mxu0 %v166
  %426 = vmatmul.mubr.f32.gmra.mrb[0].mxu0 %v17
  %v427 = vpop.f32.mrb[0].mxu0
  %v428 = vadd.f32 0.0, %v427
  %v429 = vpop.f32.mrb[0].mxu0
  %430 = vmatprep.mubr.f32.mxu0 %v169
  %431 = vmatmul.mubr.f32.gmra.mrb[0].mxu0 %v19
  %v432 = vpop.f32.mrb[0].mxu0
  %v433 = vadd.f32 0.0, %v432
  %v434 = vpop.f32.mrb[0].mxu0
  %435 = vmatprep.mubr.f32.mxu0 %v172
  %436 = vmatmul.mubr.f32.gmra.mrb[0].mxu0 %v21
  %v437 = vpop.f32.mrb[0].mxu0
  %v438 = vadd.f32 0.0, %v437
  %v439 = vpop.f32.mrb[0].mxu0
  %440 = vmatprep.mubr.f32.mxu0 %v175
  %441 = vmatmul.mubr.f32.gmra.mrb[0].mxu0 %v23
  %v442 = vpop.f32.mrb[0].mxu0
  %v443 = vadd.f32 0.0, %v442
  %v444 = vpop.f32.mrb[0].mxu0
  %445 = vmatprep.mubr.f32.mxu0 %v178
  %446 = vmatmul.mubr.f32.gmra.mrb[0].mxu0 %v25
  %v447 = vpop.f32.mrb[0].mxu0
  %v448 = vadd.f32 0.0, %v447
  %v449 = vpop.f32.mrb[0].mxu0
  %450 = vmatprep.mubr.f32.mxu0 %v181
  %451 = vmatmul.mubr.f32.gmra.mrb[0].mxu0 %v27
  %v452 = vpop.f32.mrb[0].mxu0
  %v453 = vadd.f32 0.0, %v452
  %v454 = vpop.f32.mrb[0].mxu0
  %455 = vmatprep.mubr.f32.mxu0 %v184
  %456 = vmatmul.mubr.f32.gmra.mrb[0].mxu0 %v29
  %v457 = vpop.f32.mrb[0].mxu0
  %v458 = vadd.f32 0.0, %v457
  %v459 = vpop.f32.mrb[0].mxu0
  %460 = vmatprep.mubr.f32.mxu0 %v187
  %461 = vmatmul.mubr.f32.gmra.mrb[0].mxu0 %v31
  %v462 = vpop.f32.mrb[0].mxu0
  %v463 = vadd.f32 0.0, %v462
  %v464 = vpop.f32.mrb[0].mxu0
  %465 = vmatprep.mubr.f32.mxu0 %v190
  %466 = vmatmul.mubr.f32.gmra.mrb[0].mxu0 %v33
  %v467 = vpop.f32.mrb[0].mxu0
  %v468 = vadd.f32 0.0, %v467
  %v469 = vpop.f32.mrb[0].mxu0
  %470 = vmatprep.mubr.f32.mxu0 %v193
  %471 = vmatmul.mubr.f32.gmra.mrb[0].mxu0 %v35
  %v472 = vpop.f32.mrb[0].mxu0
  %v473 = vadd.f32 0.0, %v472
  %v474 = vpop.f32.mrb[0].mxu0
  %475 = vmatprep.mubr.f32.mxu0 %v196
  %476 = vmatmul.mubr.f32.gmra.mrb[0].mxu0 %v37
  %v477 = vpop.f32.mrb[0].mxu0
  %v478 = vadd.f32 0.0, %v477
  %v479 = vpop.f32.mrb[0].mxu0
  %480 = vmatprep.mubr.f32.mxu0 %v199
  %481 = vmatmul.mubr.f32.gmra.mrb[0].mxu0 %v39
  %v482 = vpop.f32.mrb[0].mxu0
  %v483 = vadd.f32 0.0, %v482
  %v484 = vpop.f32.mrb[0].mxu0
  %485 = vmatprep.mubr.f32.mxu0 %v202
  %486 = vmatmul.mubr.f32.gmra.mrb[0].mxu0 %v41
  %v487 = vpop.f32.mrb[0].mxu0
  %v488 = vadd.f32 0.0, %v487
  %v489 = vpop.f32.mrb[0].mxu0
  %490 = vmatprep.mubr.f32.mxu0 %v205
  %491 = vmatmul.mubr.f32.gmra.mrb[0].mxu0 %v43
  %v492 = vpop.f32.mrb[0].mxu0
  %v493 = vadd.f32 0.0, %v492
  %v494 = vpop.f32.mrb[0].mxu0
  %495 = vmatprep.mubr.f32.mxu0 %v208
  %496 = vmatmul.mubr.f32.gmra.mrb[0].mxu0 %v45
  %v497 = vpop.f32.mrb[0].mxu0
  %v498 = vadd.f32 0.0, %v497
  %v499 = vpop.f32.mrb[0].mxu0
  %500 = vmatprep.mubr.f32.mxu0 %v211
  %501 = vmatmul.mubr.f32.gmra.mrb[0].mxu0 %v47
  %v502 = vpop.f32.mrb[0].mxu0
  %v503 = vadd.f32 0.0, %v502
  %v504 = vpop.f32.mrb[0].mxu0
  %505 = vmatprep.mubr.f32.mxu0 %v214
  %506 = vmatmul.mubr.f32.gmra.mrb[0].mxu0 %v49
  %v507 = vpop.f32.mrb[0].mxu0
  %v508 = vadd.f32 0.0, %v507
  %v509 = vpop.f32.mrb[0].mxu0
  %510 = vmatprep.mubr.f32.mxu0 %v217
  %511 = vmatmul.mubr.f32.gmra.mrb[0].mxu0 %v51
  %v512 = vpop.f32.mrb[0].mxu0
  %v513 = vadd.f32 0.0, %v512
  %v514 = vpop.f32.mrb[0].mxu0
  %515 = vmatprep.mubr.f32.mxu0 %v220
  %516 = vmatmul.mubr.f32.gmra.mrb[0].mxu0 %v53
  %v517 = vpop.f32.mrb[0].mxu0
  %v518 = vadd.f32 0.0, %v517
  %v519 = vpop.f32.mrb[0].mxu0
  %520 = vmatprep.mubr.f32.mxu0 %v223
  %521 = vmatmul.mubr.f32.gmra.mrb[0].mxu0 %v55
  %v522 = vpop.f32.mrb[0].mxu0
  %v523 = vadd.f32 0.0, %v522
  %v524 = vpop.f32.mrb[0].mxu0
  %525 = vmatprep.mubr.f32.mxu0 %v226
  %526 = vmatmul.mubr.f32.gmra.mrb[0].mxu0 %v57
  %v527 = vpop.f32.mrb[0].mxu0
  %v528 = vadd.f32 0.0, %v527
  %v529 = vpop.f32.mrb[0].mxu0
  %530 = vmatprep.mubr.f32.mxu0 %v229
  %531 = vmatmul.mubr.f32.gmra.mrb[0].mxu0 %v59
  %v532 = vpop.f32.mrb[0].mxu0
  %v533 = vadd.f32 0.0, %v532
  %v534 = vpop.f32.mrb[0].mxu0
  %535 = vmatprep.mubr.f32.mxu0 %v232
  %536 = vmatmul.mubr.f32.gmra.mrb[0].mxu0 %v61
  %v537 = vpop.f32.mrb[0].mxu0
  %v538 = vadd.f32 0.0, %v537
  %v539 = vpop.f32.mrb[0].mxu0
  %540 = vmatprep.mubr.f32.mxu0 %v235
  %541 = vmatmul.mubr.f32.gmra.mrb[0].mxu0 %v63
  %v542 = vpop.f32.mrb[0].mxu0
  %v543 = vadd.f32 0.0, %v542
  %v544 = vpop.f32.mrb[0].mxu0
  %545 = vmatprep.mubr.f32.mxu0 %v238
  %546 = vmatmul.mubr.f32.gmra.mrb[0].mxu0 %v65
  %v547 = vpop.f32.mrb[0].mxu0
  %v548 = vadd.f32 0.0, %v547
  %v549 = vpop.f32.mrb[0].mxu0
  %550 = vmatprep.mubr.f32.mxu0 %v241
  %551 = vmatmul.mubr.f32.gmra.mrb[0].mxu0 %v67
  %v552 = vpop.f32.mrb[0].mxu0
  %v553 = vadd.f32 0.0, %v552
  %v554 = vpop.f32.mrb[0].mxu0
  %555 = vmatprep.mubr.f32.mxu0 %v244
  %556 = vmatmul.mubr.f32.gmra.mrb[0].mxu0 %v69
  %v557 = vpop.f32.mrb[0].mxu0
  %v558 = vadd.f32 0.0, %v557
  %v559 = vpop.f32.mrb[0].mxu0
  %560 = vmatprep.mubr.f32.mxu0 %v247
  %561 = vmatmul.mubr.f32.gmra.mrb[0].mxu0 %v71
  %v562 = vpop.f32.mrb[0].mxu0
  %v563 = vadd.f32 0.0, %v562
  %v564 = vpop.f32.mrb[0].mxu0
  %565 = vmatprep.mubr.f32.mxu0 %v250
  %566 = vmatmul.mubr.f32.gmra.mrb[0].mxu0 %v73
  %v567 = vpop.f32.mrb[0].mxu0
  %v568 = vadd.f32 0.0, %v567
  %v569 = vpop.f32.mrb[0].mxu0
  %570 = vmatprep.mubr.f32.mxu0 %v253
  %571 = vmatmul.mubr.f32.gmra.mrb[0].mxu0 %v75
  %v572 = vpop.f32.mrb[0].mxu0
  %v573 = vadd.f32 0.0, %v572
  %v574 = vpop.f32.mrb[0].mxu0
  %575 = vmatprep.mubr.f32.mxu0 %v256
  %576 = vmatmul.mubr.f32.gmra.mrb[0].mxu0 %v77
  %v577 = vpop.f32.mrb[0].mxu0
  %v578 = vadd.f32 0.0, %v577
  %v579 = vpop.f32.mrb[0].mxu0
  %580 = vmatprep.mubr.f32.mxu0 %v259
  %581 = vmatmul.mubr.f32.gmra.mrb[0].mxu0 %v79
  %v582 = vpop.f32.mrb[0].mxu0
  %v583 = vadd.f32 0.0, %v582
  %v584 = vpop.f32.mrb[0].mxu0
  %585 = vmatprep.mubr.f32.mxu0 %v262
  %586 = vmatmul.mubr.f32.gmra.mrb[0].mxu0 %v81
  %v587 = vpop.f32.mrb[0].mxu0
  %v588 = vadd.f32 0.0, %v587
  %v589 = vpop.f32.mrb[0].mxu0
  %590 = vmatprep.mubr.f32.mxu0 %v265
  %591 = vmatmul.mubr.f32.gmra.mrb[0].mxu0 %v83
  %v592 = vpop.f32.mrb[0].mxu0
  %v593 = vadd.f32 0.0, %v592
  %v594 = vpop.f32.mrb[0].mxu0
  %595 = vmatprep.mubr.f32.mxu0 %v268
  %596 = vmatmul.mubr.f32.gmra.mrb[0].mxu0 %v85
  %v597 = vpop.f32.mrb[0].mxu0
  %v598 = vadd.f32 0.0, %v597
  %v599 = vpop.f32.mrb[0].mxu0
  %600 = vmatprep.mubr.f32.mxu0 %v271
  %601 = vmatmul.mubr.f32.gmra.mrb[0].mxu0 %v87
  %v602 = vpop.f32.mrb[0].mxu0
  %v603 = vadd.f32 0.0, %v602
  %v604 = vpop.f32.mrb[0].mxu0
  %605 = vmatprep.mubr.f32.mxu0 %v274
  %606 = vmatmul.mubr.f32.gmra.mrb[0].mxu0 %v89
  %v607 = vpop.f32.mrb[0].mxu0
  %v608 = vadd.f32 0.0, %v607
  %v609 = vpop.f32.mrb[0].mxu0
  %610 = vmatprep.mubr.f32.mxu0 %v277
  %611 = vmatmul.mubr.f32.gmra.mrb[0].mxu0 %v91
  %v612 = vpop.f32.mrb[0].mxu0
  %v613 = vadd.f32 0.0, %v612
  %v614 = vpop.f32.mrb[0].mxu0
  %615 = vmatprep.mubr.f32.mxu0 %v280
  %616 = vmatmul.mubr.f32.gmra.mrb[0].mxu0 %v93
  %v617 = vpop.f32.mrb[0].mxu0
  %v618 = vadd.f32 0.0, %v617
  %v619 = vpop.f32.mrb[0].mxu0
  %620 = vmatprep.mubr.f32.mxu0 %v283
  %621 = vmatmul.mubr.f32.gmra.mrb[0].mxu0 %v95
  %v622 = vpop.f32.mrb[0].mxu0
  %v623 = vadd.f32 0.0, %v622
  %v624 = vpop.f32.mrb[0].mxu0
  %625 = vmatprep.mubr.f32.mxu0 %v286
  %626 = vmatmul.mubr.f32.gmra.mrb[0].mxu0 %v97
  %v627 = vpop.f32.mrb[0].mxu0
  %v628 = vadd.f32 0.0, %v627
  %v629 = vpop.f32.mrb[0].mxu0
  %630 = vmatprep.mubr.f32.mxu0 %v289
  %631 = vmatmul.mubr.f32.gmra.mrb[0].mxu0 %v99
  %v632 = vpop.f32.mrb[0].mxu0
  %v633 = vadd.f32 0.0, %v632
  %v634 = vpop.f32.mrb[0].mxu0
  %635 = vmatprep.mubr.f32.mxu0 %v292
  %636 = vmatmul.mubr.f32.gmra.mrb[0].mxu0 %v101
  %v637 = vpop.f32.mrb[0].mxu0
  %v638 = vadd.f32 0.0, %v637
  %v639 = vpop.f32.mrb[0].mxu0
  %640 = vmatprep.mubr.f32.mxu0 %v295
  %641 = vmatmul.mubr.f32.gmra.mrb[0].mxu0 %v103
  %v642 = vpop.f32.mrb[0].mxu0
  %v643 = vadd.f32 0.0, %v642
  %v644 = vpop.f32.mrb[0].mxu0
  %645 = vmatprep.mubr.f32.mxu0 %v298
  %646 = vmatmul.mubr.f32.gmra.mrb[0].mxu0 %v105
  %v647 = vpop.f32.mrb[0].mxu0
  %v648 = vadd.f32 0.0, %v647
  %v649 = vpop.f32.mrb[0].mxu0
  %650 = vmatprep.mubr.f32.mxu0 %v301
  %651 = vmatmul.mubr.f32.gmra.mrb[0].mxu0 %v107
  %v652 = vpop.f32.mrb[0].mxu0
  %v653 = vadd.f32 0.0, %v652
  %v654 = vpop.f32.mrb[0].mxu0
  %655 = vmatprep.mubr.f32.mxu0 %v304
  %656 = vmatmul.mubr.f32.gmra.mrb[0].mxu0 %v109
  %v657 = vpop.f32.mrb[0].mxu0
  %v658 = vadd.f32 0.0, %v657
  %v659 = vpop.f32.mrb[0].mxu0
  %660 = vmatprep.mubr.f32.mxu0 %v307
  %661 = vmatmul.mubr.f32.gmra.mrb[0].mxu0 %v111
  %v662 = vpop.f32.mrb[0].mxu0
  %v663 = vadd.f32 0.0, %v662
  %v664 = vpop.f32.mrb[0].mxu0
  %665 = vmatprep.mubr.f32.mxu0 %v310
  %666 = vmatmul.mubr.f32.gmra.mrb[0].mxu0 %v113
  %v667 = vpop.f32.mrb[0].mxu0
  %v668 = vadd.f32 0.0, %v667
  %v669 = vpop.f32.mrb[0].mxu0
  %670 = vmatprep.mubr.f32.mxu0 %v313
  %671 = vmatmul.mubr.f32.gmra.mrb[0].mxu0 %v115
  %v672 = vpop.f32.mrb[0].mxu0
  %v673 = vadd.f32 0.0, %v672
  %v674 = vpop.f32.mrb[0].mxu0
  %675 = vmatprep.mubr.f32.mxu0 %v316
  %676 = vmatmul.mubr.f32.gmra.mrb[0].mxu0 %v117
  %v677 = vpop.f32.mrb[0].mxu0
  %v678 = vadd.f32 0.0, %v677
  %v679 = vpop.f32.mrb[0].mxu0
  %680 = vmatprep.mubr.f32.mxu0 %v319
  %681 = vmatmul.mubr.f32.gmra.mrb[0].mxu0 %v119
  %v682 = vpop.f32.mrb[0].mxu0
  %v683 = vadd.f32 0.0, %v682
  %v684 = vpop.f32.mrb[0].mxu0
  %685 = vmatprep.mubr.f32.mxu0 %v322
  %686 = vmatmul.mubr.f32.gmra.mrb[0].mxu0 %v121
  %v687 = vpop.f32.mrb[0].mxu0
  %v688 = vadd.f32 0.0, %v687
  %v689 = vpop.f32.mrb[0].mxu0
  %690 = vmatprep.mubr.f32.mxu0 %v325
  %691 = vmatmul.mubr.f32.gmra.mrb[0].mxu0 %v123
  %v692 = vpop.f32.mrb[0].mxu0
  %v693 = vadd.f32 0.0, %v692
  %v694 = vpop.f32.mrb[0].mxu0
  %695 = vmatprep.mubr.f32.mxu0 %v328
  %696 = vmatmul.mubr.f32.gmra.mrb[0].mxu0 %v125
  %v697 = vpop.f32.mrb[0].mxu0
  %v698 = vadd.f32 0.0, %v697
  %v699 = vpop.f32.mrb[0].mxu0
  %700 = vmatprep.mubr.f32.mxu0 %v331
  %701 = vmatmul.mubr.f32.gmra.mrb[0].mxu0 %v127
  %v702 = vpop.f32.mrb[0].mxu0
  %v703 = vadd.f32 0.0, %v702
  %v704 = vpop.f32.mrb[0].mxu0
  %705 = vmatprep.mubr.f32.mxu0 %v334
  %706 = vmatmul.mubr.f32.gmra.mrb[0].mxu0 %v129
  %v707 = vpop.f32.mrb[0].mxu0
  %v708 = vadd.f32 0.0, %v707
  %v709 = vpop.f32.mrb[0].mxu0
  %710 = vmatprep.mubr.f32.mxu0 %v337
  %711 = vmatmul.mubr.f32.gmra.mrb[0].mxu0 %v131
  %v712 = vpop.f32.mrb[0].mxu0
  %v713 = vadd.f32 0.0, %v712
  %v714 = vpop.f32.mrb[0].mxu0
  %715 = vmatprep.mubr.f32.mxu0 %v340
  %716 = vmatmul.mubr.f32.gmra.mrb[0].mxu0 %v133
  %v717 = vpop.f32.mrb[0].mxu0
  %v718 = vadd.f32 0.0, %v717
  %v719 = vpop.f32.mrb[0].mxu0
  %720 = vmatprep.mubr.f32.mxu0 %v343
  %721 = vmatmul.mubr.f32.gmra.mrb[0].mxu0 %v135
  %v722 = vpop.f32.mrb[0].mxu0
  %v723 = vadd.f32 0.0, %v722
  %v724 = vpop.f32.mrb[0].mxu0
  %725 = vmatprep.mubr.f32.mxu0 %v346
  %726 = vmatmul.mubr.f32.gmra.mrb[0].mxu0 %v137
  %v727 = vpop.f32.mrb[0].mxu0
  %v728 = vadd.f32 0.0, %v727
  %v729 = vpop.f32.mrb[0].mxu0
  %730 = vmatprep.mubr.f32.mxu0 %v349
  %731 = vmatmul.mubr.f32.gmra.mrb[0].mxu0 %v139
  %v732 = vpop.f32.mrb[0].mxu0
  %v733 = vadd.f32 0.0, %v732
  %v734 = vpop.f32.mrb[0].mxu0
  %735 = vmatprep.mubr.f32.mxu0 %v352
  %736 = vmatmul.mubr.f32.gmra.mrb[0].mxu0 %v141
  %v737 = vpop.f32.mrb[0].mxu0
  %v738 = vadd.f32 0.0, %v737
  %v739 = vpop.f32.mrb[0].mxu0
  %740 = vmatprep.mubr.f32.mxu0 %v355
  %741 = vmatmul.mubr.f32.gmra.mrb[0].mxu0 %v143
  %v742 = vpop.f32.mrb[0].mxu0
  %v743 = vadd.f32 0.0, %v742
  %v744 = vpop.f32.mrb[0].mxu0
  %745 = vdwg.mxu0
  %v746 = vld [vmem:[%s2] sm:$0x1]
  %v748 = vlaneseq
  %v749 = vshrl.u32 %v748, 7
  %v750 = vsub.s32 0, %v749
  %v751 = vrot.slane %v746, %v750
  %v753 = vmul.f32 %v428, %v751
  %v754 = vmul.f32 %v433, %v751
  %v755 = vmul.f32 %v438, %v751
  %v756 = vmul.f32 %v443, %v751
  %v757 = vmul.f32 %v448, %v751
  %v758 = vmul.f32 %v453, %v751
  %v759 = vmul.f32 %v458, %v751
  %v760 = vmul.f32 %v463, %v751
  %v761 = vmul.f32 %v468, %v751
  %v762 = vmul.f32 %v473, %v751
  %v763 = vmul.f32 %v478, %v751
  %v764 = vmul.f32 %v483, %v751
  %v765 = vmul.f32 %v488, %v751
  %v766 = vmul.f32 %v493, %v751
  %v767 = vmul.f32 %v498, %v751
  %v768 = vmul.f32 %v503, %v751
  %v769 = vmul.f32 %v508, %v751
  %v770 = vmul.f32 %v513, %v751
  %v771 = vmul.f32 %v518, %v751
  %v772 = vmul.f32 %v523, %v751
  %v773 = vmul.f32 %v528, %v751
  %v774 = vmul.f32 %v533, %v751
  %v775 = vmul.f32 %v538, %v751
  %v776 = vmul.f32 %v543, %v751
  %v777 = vmul.f32 %v548, %v751
  %v778 = vmul.f32 %v553, %v751
  %v779 = vmul.f32 %v558, %v751
  %v780 = vmul.f32 %v563, %v751
  %v781 = vmul.f32 %v568, %v751
  %v782 = vmul.f32 %v573, %v751
  %v783 = vmul.f32 %v578, %v751
  %v784 = vmul.f32 %v583, %v751
  %v785 = vmul.f32 %v588, %v751
  %v786 = vmul.f32 %v593, %v751
  %v787 = vmul.f32 %v598, %v751
  %v788 = vmul.f32 %v603, %v751
  %v789 = vmul.f32 %v608, %v751
  %v790 = vmul.f32 %v613, %v751
  %v791 = vmul.f32 %v618, %v751
  %v792 = vmul.f32 %v623, %v751
  %v793 = vmul.f32 %v628, %v751
  %v794 = vmul.f32 %v633, %v751
  %v795 = vmul.f32 %v638, %v751
  %v796 = vmul.f32 %v643, %v751
  %v797 = vmul.f32 %v648, %v751
  %v798 = vmul.f32 %v653, %v751
  %v799 = vmul.f32 %v658, %v751
  %v800 = vmul.f32 %v663, %v751
  %v801 = vmul.f32 %v668, %v751
  %v802 = vmul.f32 %v673, %v751
  %v803 = vmul.f32 %v678, %v751
  %v804 = vmul.f32 %v683, %v751
  %v805 = vmul.f32 %v688, %v751
  %v806 = vmul.f32 %v693, %v751
  %v807 = vmul.f32 %v698, %v751
  %v808 = vmul.f32 %v703, %v751
  %v809 = vmul.f32 %v708, %v751
  %v810 = vmul.f32 %v713, %v751
  %v811 = vmul.f32 %v718, %v751
  %v812 = vmul.f32 %v723, %v751
  %v813 = vmul.f32 %v728, %v751
  %v814 = vmul.f32 %v733, %v751
  %v815 = vmul.f32 %v738, %v751
  %v816 = vmul.f32 %v743, %v751
  %v817 = vld [vmem:[%s3] sm:$0x1]
  %v819 = vlaneseq
  %v820 = vshrl.u32 %v819, 7
  %v821 = vsub.s32 0, %v820
  %v822 = vrot.slane %v817, %v821
  %v824 = vadd.f32 %v753, %v822
  %v825 = vadd.f32 %v754, %v822
  %v826 = vadd.f32 %v755, %v822
  %v827 = vadd.f32 %v756, %v822
  %v828 = vadd.f32 %v757, %v822
  %v829 = vadd.f32 %v758, %v822
  %v830 = vadd.f32 %v759, %v822
  %v831 = vadd.f32 %v760, %v822
  %v832 = vadd.f32 %v761, %v822
  %v833 = vadd.f32 %v762, %v822
  %v834 = vadd.f32 %v763, %v822
  %v835 = vadd.f32 %v764, %v822
  %v836 = vadd.f32 %v765, %v822
  %v837 = vadd.f32 %v766, %v822
  %v838 = vadd.f32 %v767, %v822
  %v839 = vadd.f32 %v768, %v822
  %v840 = vadd.f32 %v769, %v822
  %v841 = vadd.f32 %v770, %v822
  %v842 = vadd.f32 %v771, %v822
  %v843 = vadd.f32 %v772, %v822
  %v844 = vadd.f32 %v773, %v822
  %v845 = vadd.f32 %v774, %v822
  %v846 = vadd.f32 %v775, %v822
  %v847 = vadd.f32 %v776, %v822
  %v848 = vadd.f32 %v777, %v822
  %v849 = vadd.f32 %v778, %v822
  %v850 = vadd.f32 %v779, %v822
  %v851 = vadd.f32 %v780, %v822
  %v852 = vadd.f32 %v781, %v822
  %v853 = vadd.f32 %v782, %v822
  %v854 = vadd.f32 %v783, %v822
  %v855 = vadd.f32 %v784, %v822
  %v856 = vadd.f32 %v785, %v822
  %v857 = vadd.f32 %v786, %v822
  %v858 = vadd.f32 %v787, %v822
  %v859 = vadd.f32 %v788, %v822
  %v860 = vadd.f32 %v789, %v822
  %v861 = vadd.f32 %v790, %v822
  %v862 = vadd.f32 %v791, %v822
  %v863 = vadd.f32 %v792, %v822
  %v864 = vadd.f32 %v793, %v822
  %v865 = vadd.f32 %v794, %v822
  %v866 = vadd.f32 %v795, %v822
  %v867 = vadd.f32 %v796, %v822
  %v868 = vadd.f32 %v797, %v822
  %v869 = vadd.f32 %v798, %v822
  %v870 = vadd.f32 %v799, %v822
  %v871 = vadd.f32 %v800, %v822
  %v872 = vadd.f32 %v801, %v822
  %v873 = vadd.f32 %v802, %v822
  %v874 = vadd.f32 %v803, %v822
  %v875 = vadd.f32 %v804, %v822
  %v876 = vadd.f32 %v805, %v822
  %v877 = vadd.f32 %v806, %v822
  %v878 = vadd.f32 %v807, %v822
  %v879 = vadd.f32 %v808, %v822
  %v880 = vadd.f32 %v809, %v822
  %v881 = vadd.f32 %v810, %v822
  %v882 = vadd.f32 %v811, %v822
  %v883 = vadd.f32 %v812, %v822
  %v884 = vadd.f32 %v813, %v822
  %v885 = vadd.f32 %v814, %v822
  %v886 = vadd.f32 %v815, %v822
  %v887 = vadd.f32 %v816, %v822
  %v888 = vmax.f32 %v824, 0.0
  %v889 = vmax.f32 %v825, 0.0
  %v890 = vmax.f32 %v826, 0.0
  %v891 = vmax.f32 %v827, 0.0
  %v892 = vmax.f32 %v828, 0.0
  %v893 = vmax.f32 %v829, 0.0
  %v894 = vmax.f32 %v830, 0.0
  %v895 = vmax.f32 %v831, 0.0
  %v896 = vmax.f32 %v832, 0.0
  %v897 = vmax.f32 %v833, 0.0
  %v898 = vmax.f32 %v834, 0.0
  %v899 = vmax.f32 %v835, 0.0
  %v900 = vmax.f32 %v836, 0.0
  %v901 = vmax.f32 %v837, 0.0
  %v902 = vmax.f32 %v838, 0.0
  %v903 = vmax.f32 %v839, 0.0
  %v904 = vmax.f32 %v840, 0.0
  %v905 = vmax.f32 %v841, 0.0
  %v906 = vmax.f32 %v842, 0.0
  %v907 = vmax.f32 %v843, 0.0
  %v908 = vmax.f32 %v844, 0.0
  %v909 = vmax.f32 %v845, 0.0
  %v910 = vmax.f32 %v846, 0.0
  %v911 = vmax.f32 %v847, 0.0
  %v912 = vmax.f32 %v848, 0.0
  %v913 = vmax.f32 %v849, 0.0
  %v914 = vmax.f32 %v850, 0.0
  %v915 = vmax.f32 %v851, 0.0
  %v916 = vmax.f32 %v852, 0.0
  %v917 = vmax.f32 %v853, 0.0
  %v918 = vmax.f32 %v854, 0.0
  %v919 = vmax.f32 %v855, 0.0
  %v920 = vmax.f32 %v856, 0.0
  %v921 = vmax.f32 %v857, 0.0
  %v922 = vmax.f32 %v858, 0.0
  %v923 = vmax.f32 %v859, 0.0
  %v924 = vmax.f32 %v860, 0.0
  %v925 = vmax.f32 %v861, 0.0
  %v926 = vmax.f32 %v862, 0.0
  %v927 = vmax.f32 %v863, 0.0
  %v928 = vmax.f32 %v864, 0.0
  %v929 = vmax.f32 %v865, 0.0
  %v930 = vmax.f32 %v866, 0.0
  %v931 = vmax.f32 %v867, 0.0
  %v932 = vmax.f32 %v868, 0.0
  %v933 = vmax.f32 %v869, 0.0
  %v934 = vmax.f32 %v870, 0.0
  %v935 = vmax.f32 %v871, 0.0
  %v936 = vmax.f32 %v872, 0.0
  %v937 = vmax.f32 %v873, 0.0
  %v938 = vmax.f32 %v874, 0.0
  %v939 = vmax.f32 %v875, 0.0
  %v940 = vmax.f32 %v876, 0.0
  %v941 = vmax.f32 %v877, 0.0
  %v942 = vmax.f32 %v878, 0.0
  %v943 = vmax.f32 %v879, 0.0
  %v944 = vmax.f32 %v880, 0.0
  %v945 = vmax.f32 %v881, 0.0
  %v946 = vmax.f32 %v882, 0.0
  %v947 = vmax.f32 %v883, 0.0
  %v948 = vmax.f32 %v884, 0.0
  %v949 = vmax.f32 %v885, 0.0
  %v950 = vmax.f32 %v886, 0.0
  %v951 = vmax.f32 %v887, 0.0
  %vm952 = vcmask 523264
  %953 = vst.msk [vmem:[%s4] sm:$0xff] %vm952, %v888
  %954 = vst.msk [vmem:[%s4 + $0x8] sm:$0xff] %vm952, %v889
  %955 = vst.msk [vmem:[%s4 + $0x10] sm:$0xff] %vm952, %v890
  %956 = vst.msk [vmem:[%s4 + $0x18] sm:$0xff] %vm952, %v891
  %957 = vst.msk [vmem:[%s4 + $0x20] sm:$0xff] %vm952, %v892
  %958 = vst.msk [vmem:[%s4 + $0x28] sm:$0xff] %vm952, %v893
  %959 = vst.msk [vmem:[%s4 + $0x30] sm:$0xff] %vm952, %v894
  %960 = vst.msk [vmem:[%s4 + $0x38] sm:$0xff] %vm952, %v895
  %961 = vst.msk [vmem:[%s4 + $0x40] sm:$0xff] %vm952, %v896
  %962 = vst.msk [vmem:[%s4 + $0x48] sm:$0xff] %vm952, %v897
  %963 = vst.msk [vmem:[%s4 + $0x50] sm:$0xff] %vm952, %v898
  %964 = vst.msk [vmem:[%s4 + $0x58] sm:$0xff] %vm952, %v899
  %965 = vst.msk [vmem:[%s4 + $0x60] sm:$0xff] %vm952, %v900
  %966 = vst.msk [vmem:[%s4 + $0x68] sm:$0xff] %vm952, %v901
  %967 = vst.msk [vmem:[%s4 + $0x70] sm:$0xff] %vm952, %v902
  %968 = vst.msk [vmem:[%s4 + $0x78] sm:$0xff] %vm952, %v903
  %969 = vst.msk [vmem:[%s4 + $0x80] sm:$0xff] %vm952, %v904
  %970 = vst.msk [vmem:[%s4 + $0x88] sm:$0xff] %vm952, %v905
  %971 = vst.msk [vmem:[%s4 + $0x90] sm:$0xff] %vm952, %v906
  %972 = vst.msk [vmem:[%s4 + $0x98] sm:$0xff] %vm952, %v907
  %973 = vst.msk [vmem:[%s4 + $0xa0] sm:$0xff] %vm952, %v908
  %974 = vst.msk [vmem:[%s4 + $0xa8] sm:$0xff] %vm952, %v909
  %975 = vst.msk [vmem:[%s4 + $0xb0] sm:$0xff] %vm952, %v910
  %976 = vst.msk [vmem:[%s4 + $0xb8] sm:$0xff] %vm952, %v911
  %977 = vst.msk [vmem:[%s4 + $0xc0] sm:$0xff] %vm952, %v912
  %978 = vst.msk [vmem:[%s4 + $0xc8] sm:$0xff] %vm952, %v913
  %979 = vst.msk [vmem:[%s4 + $0xd0] sm:$0xff] %vm952, %v914
  %980 = vst.msk [vmem:[%s4 + $0xd8] sm:$0xff] %vm952, %v915
  %981 = vst.msk [vmem:[%s4 + $0xe0] sm:$0xff] %vm952, %v916
  %982 = vst.msk [vmem:[%s4 + $0xe8] sm:$0xff] %vm952, %v917
  %983 = vst.msk [vmem:[%s4 + $0xf0] sm:$0xff] %vm952, %v918
  %984 = vst.msk [vmem:[%s4 + $0xf8] sm:$0xff] %vm952, %v919
  %985 = vst.msk [vmem:[%s4 + $0x100] sm:$0xff] %vm952, %v920
  %986 = vst.msk [vmem:[%s4 + $0x108] sm:$0xff] %vm952, %v921
  %987 = vst.msk [vmem:[%s4 + $0x110] sm:$0xff] %vm952, %v922
  %988 = vst.msk [vmem:[%s4 + $0x118] sm:$0xff] %vm952, %v923
  %989 = vst.msk [vmem:[%s4 + $0x120] sm:$0xff] %vm952, %v924
  %990 = vst.msk [vmem:[%s4 + $0x128] sm:$0xff] %vm952, %v925
  %991 = vst.msk [vmem:[%s4 + $0x130] sm:$0xff] %vm952, %v926
  %992 = vst.msk [vmem:[%s4 + $0x138] sm:$0xff] %vm952, %v927
  %993 = vst.msk [vmem:[%s4 + $0x140] sm:$0xff] %vm952, %v928
  %994 = vst.msk [vmem:[%s4 + $0x148] sm:$0xff] %vm952, %v929
  %995 = vst.msk [vmem:[%s4 + $0x150] sm:$0xff] %vm952, %v930
  %996 = vst.msk [vmem:[%s4 + $0x158] sm:$0xff] %vm952, %v931
  %997 = vst.msk [vmem:[%s4 + $0x160] sm:$0xff] %vm952, %v932
  %998 = vst.msk [vmem:[%s4 + $0x168] sm:$0xff] %vm952, %v933
  %999 = vst.msk [vmem:[%s4 + $0x170] sm:$0xff] %vm952, %v934
  %1000 = vst.msk [vmem:[%s4 + $0x178] sm:$0xff] %vm952, %v935
  %1001 = vst.msk [vmem:[%s4 + $0x180] sm:$0xff] %vm952, %v936
  %1002 = vst.msk [vmem:[%s4 + $0x188] sm:$0xff] %vm952, %v937
  %1003 = vst.msk [vmem:[%s4 + $0x190] sm:$0xff] %vm952, %v938
  %1004 = vst.msk [vmem:[%s4 + $0x198] sm:$0xff] %vm952, %v939
  %1005 = vst.msk [vmem:[%s4 + $0x1a0] sm:$0xff] %vm952, %v940
  %1006 = vst.msk [vmem:[%s4 + $0x1a8] sm:$0xff] %vm952, %v941
  %1007 = vst.msk [vmem:[%s4 + $0x1b0] sm:$0xff] %vm952, %v942
  %1008 = vst.msk [vmem:[%s4 + $0x1b8] sm:$0xff] %vm952, %v943
  %1009 = vst.msk [vmem:[%s4 + $0x1c0] sm:$0xff] %vm952, %v944
  %1010 = vst.msk [vmem:[%s4 + $0x1c8] sm:$0xff] %vm952, %v945
  %1011 = vst.msk [vmem:[%s4 + $0x1d0] sm:$0xff] %vm952, %v946
  %1012 = vst.msk [vmem:[%s4 + $0x1d8] sm:$0xff] %vm952, %v947
  %1013 = vst.msk [vmem:[%s4 + $0x1e0] sm:$0xff] %vm952, %v948
  %1014 = vst.msk [vmem:[%s4 + $0x1e8] sm:$0xff] %vm952, %v949
  %1015 = vst.msk [vmem:[%s4 + $0x1f0] sm:$0xff] %vm952, %v950
  %1016 = vst.msk [vmem:[%s4 + $0x1f8] sm:$0xff] %vm952, %v951
  // Predicated region
  $region18: #{tpu_custom_call.1} parent=0 // pred_check
    _
  $region19: #{tpu_custom_call.1} parent=0 // pred_check_branch
    %1018 = sbr.rel (0) target = $region21
  $region20: #{tpu_custom_call.1} parent=0 // pred_region
    _
  $region21: #{tpu_custom_call.1} parent=0 // pred_fallthru
    _
  // Predicated region
  $region22: #{tpu_custom_call.1} parent=0 // pred_check
    _
  $region23: #{tpu_custom_call.1} parent=0 // pred_check_branch
    %1020 = sbr.rel (0) target = $region25
  $region24: #{tpu_custom_call.1} parent=0 // pred_region
    _
  $region25: #{tpu_custom_call.1} parent=0 // pred_fallthru
    _

</llo_original>
